<compile_context>
chip_gen: v7x
topology: tpu7x:2x2x1
jax: 0.10.0
libtpu: 0.0.40
codegen_flags: <defaults>
</compile_context>

<pallas_src>
import math
import jax
import jax.numpy as jnp
from jax import lax
from jax.experimental import pallas as pl
from jax.experimental.pallas import tpu as pltpu


def _round_up(x, m):
    return ((x + m - 1) // m) * m


def _cparams(n_axes):
    return pltpu.CompilerParams(
        dimension_semantics=("parallel",) * n_axes,
        vmem_limit_bytes=32 * 1024 * 1024,   # < v7x 64 MiB physical VMEM; kernels need << 8 MiB
    )


# ----------------------------------------------------------------------------
# Pallas kernel: generic matmul + bias (+ optional relu).
# Activations/weights cast to bf16 IN-KERNEL (no host cast pass); f32 MXU accumulation.
# Optional N tiling gives a second parallel grid axis (v7x dual-TensorCore sharding).
# ----------------------------------------------------------------------------
def pallas_matmul(a, b, bias=None, activation=None, out_dtype=jnp.float32,
                  tile_m=256, tile_n=None):
    M, K = a.shape
    K2, N = b.shape
    assert K == K2
    if bias is None:
        bias = jnp.zeros((N,), jnp.float32)
    bias2d = bias.reshape(1, N).astype(jnp.float32)

    tile_m = min(tile_m, _round_up(M, 16))
    Mp = _round_up(M, tile_m)
    if tile_n is None:
        tile_n, Np = N, N
    else:
        tile_n = min(tile_n, _round_up(N, 128))
        Np = _round_up(N, tile_n)

    a_p = jnp.pad(a, ((0, Mp - M), (0, 0))) if Mp != M else a
    b_p = jnp.pad(b, ((0, 0), (0, Np - N))) if Np != N else b
    bias_p = jnp.pad(bias2d, ((0, 0), (0, Np - N))) if Np != N else bias2d

    def kernel(a_ref, b_ref, bias_ref, o_ref):
        acc = jnp.dot(a_ref[...].astype(jnp.bfloat16),
                      b_ref[...].astype(jnp.bfloat16),
                      preferred_element_type=jnp.float32)
        acc = acc + bias_ref[...]
        if activation == "relu":
            acc = jnp.maximum(acc, 0.0)
        o_ref[...] = acc.astype(o_ref.dtype)

    out = pl.pallas_call(
        kernel,
        out_shape=jax.ShapeDtypeStruct((Mp, Np), out_dtype),
        grid=(Mp // tile_m, Np // tile_n),
        in_specs=[
            pl.BlockSpec((tile_m, K), lambda i, j: (i, 0)),
            pl.BlockSpec((K, tile_n), lambda i, j: (0, j)),
            pl.BlockSpec((1, tile_n), lambda i, j: (0, j)),
        ],
        out_specs=pl.BlockSpec((tile_m, tile_n), lambda i, j: (i, j)),
        compiler_params=_cparams(2),
    )(a_p, b_p, bias_p)
    return out[:M, :N] if (Mp != M or Np != N) else out


# ----------------------------------------------------------------------------
# Pallas kernel: CompGCN 'rotate' message:  rotate(x_j, rel) @ W * edge_norm
#   rotate(x, r) @ W == (x * rr) @ W + (x * ri) @ W_rowswapped
#   rr = [r_re | r_re], ri = [r_im | -r_im]  (tiny per-relation tables, gathered in bf16)
# Inputs arrive ALREADY padded to a multiple of tile_e rows (padded-index gathers on host,
# padded norm = 0 so padded messages are exactly zero) -> no host pad pass over big tensors.
# TODO(synk): opn='corr' (circular correlation via rfft/irfft) has no clean Pallas equivalent;
#             using the 'rotate' composition (consistent with the RotatE-style phase init).
# ----------------------------------------------------------------------------
def pallas_message(x_j, rr_e, ri_e, norm, w, w_swap, tile_e):
    Ep, D = x_j.shape
    D_out = w.shape[1]
    norm2 = norm.reshape(Ep, 1).astype(jnp.float32)

    def kernel(x_ref, rr_ref, ri_ref, n_ref, w_ref, ws_ref, o_ref):
        xv = x_ref[...]                                             # f32 VPU math
        a = (xv * rr_ref[...].astype(jnp.float32)).astype(jnp.bfloat16)
        b = (xv * ri_ref[...].astype(jnp.float32)).astype(jnp.bfloat16)
        acc = jnp.dot(a, w_ref[...].astype(jnp.bfloat16),
                      preferred_element_type=jnp.float32)
        acc = acc + jnp.dot(b, ws_ref[...].astype(jnp.bfloat16),
                            preferred_element_type=jnp.float32)
        o_ref[...] = acc * n_ref[...]

    return pl.pallas_call(
        kernel,
        out_shape=jax.ShapeDtypeStruct((Ep, D_out), jnp.float32),
        grid=(Ep // tile_e,),
        in_specs=[
            pl.BlockSpec((tile_e, D), lambda i: (i, 0)),
            pl.BlockSpec((tile_e, D), lambda i: (i, 0)),
            pl.BlockSpec((tile_e, D), lambda i: (i, 0)),
            pl.BlockSpec((tile_e, 1), lambda i: (i, 0)),
            pl.BlockSpec((D, D_out), lambda i: (0, 0)),
            pl.BlockSpec((D, D_out), lambda i: (0, 0)),
        ],
        out_specs=pl.BlockSpec((tile_e, D_out), lambda i: (i, 0)),
        compiler_params=_cparams(1),
    )(x_j, rr_e, ri_e, norm2, w, w_swap)


# ----------------------------------------------------------------------------
# Pallas kernel: multi-head self-attention, ALL (batch*head) groups in ONE grid step.
# q, k, v : (G, Sp, dh) bf16       add_mask : (G, 1, Sp) f32 (0 or -1e9, key-padding + seq pad)
# ----------------------------------------------------------------------------
def pallas_attention(q, k, v, add_mask):
    G, Sp, dh = q.shape
    scale = 1.0 / math.sqrt(dh)

    def kernel(q_ref, k_ref, v_ref, m_ref, o_ref):
        s = jnp.einsum("gqd,gkd->gqk", q_ref[...], k_ref[...],
                       preferred_element_type=jnp.float32) * scale
        s = s + m_ref[...]                                   # broadcast over query rows
        s = s - jnp.max(s, axis=-1, keepdims=True)
        p = jnp.exp(s)
        denom = jnp.sum(p, axis=-1, keepdims=True)
        p = p * pl.reciprocal(denom, approx=True)            # EUP reciprocal
        o_ref[...] = jnp.einsum("gqk,gkd->gqd", p.astype(v_ref.dtype), v_ref[...],
                                preferred_element_type=jnp.float32)

    return pl.pallas_call(
        kernel,
        out_shape=jax.ShapeDtypeStruct((G, Sp, dh), jnp.float32),
        grid=(1,),
        in_specs=[
            pl.BlockSpec((G, Sp, dh), lambda i: (0, 0, 0)),
            pl.BlockSpec((G, Sp, dh), lambda i: (0, 0, 0)),
            pl.BlockSpec((G, Sp, dh), lambda i: (0, 0, 0)),
            pl.BlockSpec((G, 1, Sp), lambda i: (0, 0, 0)),
        ],
        out_specs=pl.BlockSpec((G, Sp, dh), lambda i: (0, 0, 0)),
        compiler_params=_cparams(1),
    )(q, k, v, add_mask)


# ----------------------------------------------------------------------------
# Pallas kernel: fused  LayerNorm( resid + (y @ Wo + bo) )     (attention out-proj + LN1)
# ----------------------------------------------------------------------------
def pallas_proj_ln(y, resid, w, b, gamma, beta, eps=1e-5, tile_m=256):
    M, K = y.shape
    N = w.shape[1]
    tile_m = min(tile_m, _round_up(M, 16))
    Mp = _round_up(M, tile_m)
    y_p = jnp.pad(y, ((0, Mp - M), (0, 0))) if Mp != M else y
    r_p = jnp.pad(resid, ((0, Mp - M), (0, 0))) if Mp != M else resid
    b2 = b.reshape(1, N).astype(jnp.float32)
    g2 = gamma.reshape(1, N).astype(jnp.float32)
    be2 = beta.reshape(1, N).astype(jnp.float32)

    def kernel(y_ref, r_ref, w_ref, b_ref, g_ref, be_ref, o_ref):
        acc = jnp.dot(y_ref[...].astype(jnp.bfloat16), w_ref[...].astype(jnp.bfloat16),
                      preferred_element_type=jnp.float32) + b_ref[...]
        z = acc + r_ref[...]
        mu = jnp.mean(z, axis=-1, keepdims=True)
        var = jnp.mean((z - mu) ** 2, axis=-1, keepdims=True)
        o_ref[...] = (z - mu) * lax.rsqrt(var + eps) * g_ref[...] + be_ref[...]

    out = pl.pallas_call(
        kernel,
        out_shape=jax.ShapeDtypeStruct((Mp, N), jnp.float32),
        grid=(Mp // tile_m,),
        in_specs=[
            pl.BlockSpec((tile_m, K), lambda i: (i, 0)),
            pl.BlockSpec((tile_m, N), lambda i: (i, 0)),
            pl.BlockSpec((K, N), lambda i: (0, 0)),
            pl.BlockSpec((1, N), lambda i: (0, 0)),
            pl.BlockSpec((1, N), lambda i: (0, 0)),
            pl.BlockSpec((1, N), lambda i: (0, 0)),
        ],
        out_specs=pl.BlockSpec((tile_m, N), lambda i: (i, 0)),
        compiler_params=_cparams(1),
    )(y_p, r_p, w, b2, g2, be2)
    return out[:M] if Mp != M else out


# ----------------------------------------------------------------------------
# Pallas kernel: fused  LayerNorm( x + relu(x @ W1 + b1) @ W2 + b2 )   (FFN + LN2)
# ----------------------------------------------------------------------------
def pallas_ffn_ln(x, w1, b1, w2, b2, gamma, beta, eps=1e-5, tile_m=256):
    M, E = x.shape
    H = w1.shape[1]
    tile_m = min(tile_m, _round_up(M, 16))
    Mp = _round_up(M, tile_m)
    x_p = jnp.pad(x, ((0, Mp - M), (0, 0))) if Mp != M else x
    b1_2 = b1.reshape(1, H).astype(jnp.float32)
    b2_2 = b2.reshape(1, E).astype(jnp.float32)
    g2 = gamma.reshape(1, E).astype(jnp.float32)
    be2 = beta.reshape(1, E).astype(jnp.float32)

    def kernel(x_ref, w1_ref, b1_ref, w2_ref, b2_ref, g_ref, be_ref, o_ref):
        xv = x_ref[...]
        h = jnp.dot(xv.astype(jnp.bfloat16), w1_ref[...].astype(jnp.bfloat16),
                    preferred_element_type=jnp.float32) + b1_ref[...]
        h = jnp.maximum(h, 0.0)
        f = jnp.dot(h.astype(jnp.bfloat16), w2_ref[...].astype(jnp.bfloat16),
                    preferred_element_type=jnp.float32) + b2_ref[...]
        z = xv + f
        mu = jnp.mean(z, axis=-1, keepdims=True)
        var = jnp.mean((z - mu) ** 2, axis=-1, keepdims=True)
        o_ref[...] = (z - mu) * lax.rsqrt(var + eps) * g_ref[...] + be_ref[...]

    out = pl.pallas_call(
        kernel,
        out_shape=jax.ShapeDtypeStruct((Mp, E), jnp.float32),
        grid=(Mp // tile_m,),
        in_specs=[
            pl.BlockSpec((tile_m, E), lambda i: (i, 0)),
            pl.BlockSpec((E, H), lambda i: (0, 0)),
            pl.BlockSpec((1, H), lambda i: (0, 0)),
            pl.BlockSpec((H, E), lambda i: (0, 0)),
            pl.BlockSpec((1, E), lambda i: (0, 0)),
            pl.BlockSpec((1, E), lambda i: (0, 0)),
            pl.BlockSpec((1, E), lambda i: (0, 0)),
        ],
        out_specs=pl.BlockSpec((tile_m, E), lambda i: (i, 0)),
        compiler_params=_cparams(1),
    )(x_p, w1, b1_2, w2, b2_2, g2, be2)
    return out[:M] if Mp != M else out


# ----------------------------------------------------------------------------
# Pallas kernel: fused  score = (xm @ fc_w + fc_b) @ ent^T.
# Entity activations transposed ONCE on host to (E, num_ent) so the kernel is a plain NN
# matmul with num_ent lane-dense on the N-tiled axis (no in-kernel XLU transpose).
# fc projection recomputed per N-tile (cheap) so the grid axis stays fully parallel.
# ----------------------------------------------------------------------------
def pallas_score(xm, fc_w, fc_b, x_ent, tile_n=512):
    B, E = xm.shape
    N = x_ent.shape[0]
    entT = x_ent.T                                     # single fused host pass, lane-dense output
    Bp = _round_up(B, 16)
    tile_n = min(tile_n, _round_up(N, 128))
    Np = _round_up(N, tile_n)
    xm_p = jnp.pad(xm, ((0, Bp - B), (0, 0))) if Bp != B else xm
    entT_p = jnp.pad(entT, ((0, 0), (0, Np - N))) if Np != N else entT
    fcb2 = fc_b.reshape(1, E).astype(jnp.float32)

    def kernel(x_ref, w_ref, b_ref, e_ref, o_ref):
        xo = jnp.dot(x_ref[...].astype(jnp.bfloat16), w_ref[...].astype(jnp.bfloat16),
                     preferred_element_type=jnp.float32) + b_ref[...]
        o_ref[...] = jnp.dot(xo.astype(jnp.bfloat16), e_ref[...].astype(jnp.bfloat16),
                             preferred_element_type=jnp.float32)

    out = pl.pallas_call(
        kernel,
        out_shape=jax.ShapeDtypeStruct((Bp, Np), jnp.float32),
        grid=(Np // tile_n,),
        in_specs=[
            pl.BlockSpec((Bp, E), lambda j: (0, 0)),
            pl.BlockSpec((E, E), lambda j: (0, 0)),
            pl.BlockSpec((1, E), lambda j: (0, 0)),
            pl.BlockSpec((E, tile_n), lambda j: (0, j)),
        ],
        out_specs=pl.BlockSpec((Bp, tile_n), lambda j: (0, j)),
        compiler_params=_cparams(1),
    )(xm_p, fc_w, fcb2, entT_p)
    return out[:B, :N]


# ----------------------------------------------------------------------------
# CompGCNConv forward (message passing; gathers / segment_sum are JAX glue)
# ----------------------------------------------------------------------------
def compgcn_conv(x, edge_index, edge_type, rel_embed, p):
    N, D = x.shape
    h = D // 2
    rel_all = jnp.concatenate([rel_embed, p["loop_rel"]], axis=0)        # (2R+1, D) f32

    # tiny per-relation rotate helper tables, stored bf16 so the gathered edge streams are bf16
    r_re, r_im = rel_all[:, :h], rel_all[:, h:]
    rr_table = jnp.concatenate([r_re, r_re], axis=-1).astype(jnp.bfloat16)
    ri_table = jnp.concatenate([r_im, -r_im], axis=-1).astype(jnp.bfloat16)

    def swap_rows(w):
        return jnp.concatenate([w[h:], w[:h]], axis=0)

    E2 = edge_index.shape[1]
    Ecnt = E2 // 2
    in_index, out_index = edge_index[:, :Ecnt], edge_index[:, Ecnt:]
    in_type, out_type = edge_type[:Ecnt], edge_type[Ecnt:]
    loop_type_idx = rel_all.shape[0] - 1

    def compute_norm(ei):
        row, col = ei[0], ei[1]
        deg = jax.ops.segment_sum(jnp.ones(row.shape[0], jnp.float32), row, num_segments=N)
        deg_inv = jnp.where(deg > 0.0, lax.rsqrt(jnp.maximum(deg, 1e-12)), 0.0)
        return deg_inv[row] * deg_inv[col]

    in_norm = compute_norm(in_index)
    out_norm = compute_norm(out_index)

    def propagate(src, dst, et, norm, w):
        Ecur = src.shape[0]
        tile_e = min(256, _round_up(Ecur, 16))
        Ep = _round_up(Ecur, tile_e)
        padn = (0, Ep - Ecur)
        # pad the tiny 1-D vectors BEFORE the gathers -> gathered tensors already padded,
        # padded norm = 0 makes the padded messages exactly zero (safe for segment_sum).
        src_p = jnp.pad(src, padn)
        dst_p = jnp.pad(dst, padn)
        et_p = jnp.pad(et, padn)
        if norm is None:
            norm = jnp.ones((Ecur,), jnp.float32)
        norm_p = jnp.pad(norm, padn)
        x_j = x[src_p]                           # (Ep, D) f32
        rr_e = rr_table[et_p]                    # (Ep, D) bf16
        ri_e = ri_table[et_p]                    # (Ep, D) bf16
        msg = pallas_message(x_j, rr_e, ri_e, norm_p, w, swap_rows(w), tile_e)
        return jax.ops.segment_sum(msg, dst_p, num_segments=N)

    in_res = propagate(in_index[0], in_index[1], in_type, in_norm, p["w_in"])
    out_res = propagate(out_index[0], out_index[1], out_type, out_norm, p["w_out"])
    loop_src = jnp.arange(N, dtype=jnp.int32)
    loop_et = jnp.full((N,), loop_type_idx, jnp.int32)
    loop_res = propagate(loop_src, loop_src, loop_et, None, p["w_loop"])

    out = (in_res + out_res + loop_res) * (1.0 / 3.0) + p["bias"]
    # TODO(synk): BatchNorm1d uses training-mode batch statistics (no running stats tracked).
    mu = jnp.mean(out, axis=0, keepdims=True)
    var = jnp.mean((out - mu) ** 2, axis=0, keepdims=True)
    out = (out - mu) * lax.rsqrt(var + 1e-5)
    out = jnp.tanh(out)                          # self.act (standard CompGCN choice)
    rel_out = pallas_matmul(rel_all, p["w_rel"])[:-1]
    return out, rel_out


# ----------------------------------------------------------------------------
# Transformer encoder layer (PyTorch TransformerEncoderLayer, norm_first=False, relu)
# ----------------------------------------------------------------------------
def transformer_layer(x_sbE, add_mask_g, lp, num_heads, Sp):
    S, B, E = x_sbE.shape
    dh = E // num_heads
    x2d = x_sbE.reshape(S * B, E)

    # fused Q|K|V projection (one matmul, bf16 output for the attention MXU path)
    qkv = pallas_matmul(x2d, lp["wqkv"], lp["bqkv"], out_dtype=jnp.bfloat16)   # (S*B, 3E)
    qkv = qkv.reshape(S, B, 3, num_heads, dh).transpose(2, 1, 3, 0, 4)          # (3, B, H, S, dh)
    pad = ((0, 0), (0, 0), (0, Sp - S), (0, 0))
    q = jnp.pad(qkv[0], pad).reshape(B * num_heads, Sp, dh)
    k = jnp.pad(qkv[1], pad).reshape(B * num_heads, Sp, dh)
    v = jnp.pad(qkv[2], pad).reshape(B * num_heads, Sp, dh)

    attn = pallas_attention(q, k, v, add_mask_g)                                # (B*H, Sp, dh)
    attn = attn.reshape(B, num_heads, Sp, dh)[:, :, :S, :]
    attn2d = attn.transpose(2, 0, 1, 3).reshape(S * B, E)

    # out-proj + residual + LN1 fused; FFN + residual + LN2 fused  (dropout = 0)
    x2d = pallas_proj_ln(attn2d, x2d, lp["wo"], lp["bo"], lp["ln1_g"], lp["ln1_b"])
    x2d = pallas_ffn_ln(x2d, lp["w1"], lp["b1"], lp["w2"], lp["b2"],
                        lp["ln2_g"], lp["ln2_b"])
    return x2d.reshape(S, B, E)


# ----------------------------------------------------------------------------
# Full CompGCNModel forward (predict_type='ent', target_ent_index=None)
# ----------------------------------------------------------------------------
def model_forward(params, batch_input_seqs, edge_index, edge_type, num_heads):
    sub = batch_input_seqs[:, 0]
    rel = batch_input_seqs[:, 1]
    quals = batch_input_seqs[:, 4:]
    bs = sub.shape[0]
    E = params["ent_emb"].shape[1]

    # --- forward_base (triple_mode, n_layer=1, dropouts=0) ---
    x, r = compgcn_conv(
        params["ent_emb"], edge_index, edge_type, params["init_rel"], params["conv1"]
    )

    sub_emb = x[sub]
    rel_emb = r[rel]
    quals_ents = quals[:, 0::2].reshape(-1)
    quals_rels = quals[:, 1::2].reshape(-1)
    qual_obj_emb = x[quals_ents].reshape(bs, -1, E)
    qual_rel_emb = r[quals_rels].reshape(bs, -1, E)
    mask = jnp.zeros((bs, quals.shape[1] + 2), dtype=bool)
    mask = mask.at[:, 2:].set(quals == 0)

    # --- concat ---
    e1 = sub_emb[:, None, :]
    re = rel_emb[:, None, :]
    qq = jnp.concatenate([qual_rel_emb, qual_obj_emb], axis=2).reshape(
        bs, 2 * qual_rel_emb.shape[1], E
    )
    stk = jnp.concatenate([e1, re, qq], axis=1).transpose(1, 0, 2)   # (S, B, E)

    # --- positional embeddings ---
    S = stk.shape[0]
    stk = stk + params["pos_emb"][:S][:, None, :]

    # --- additive attention mask (key-padding + sequence padding), Sp rounded to 16 ---
    Sp = _round_up(S, 16)
    kpm = jnp.pad(mask, ((0, 0), (0, Sp - S)), constant_values=True)            # (B, Sp)
    add_mask = jnp.where(kpm, -1e9, 0.0).astype(jnp.float32)[:, None, :]        # (B, 1, Sp)
    add_mask_g = jnp.broadcast_to(
        add_mask[:, None, :, :], (bs, num_heads, 1, Sp)
    ).reshape(bs * num_heads, 1, Sp)

    # --- transformer encoder ---
    xt = stk
    for lp in params["layers"]:
        xt = transformer_layer(xt, add_mask_g, lp, num_heads, Sp)

    xm = jnp.mean(xt, axis=0)                      # (B, E)  mean over all positions (as in ref)

    # predict_type == 'ent' : fc projection fused with scoring against all entity embeddings
    score = pallas_score(xm, params["fc_w"], params["fc_b"], x)
    return score


# ----------------------------------------------------------------------------
# Deterministic parameter initialization (matmul weights stored bf16 — identical numerics to
# in-kernel bf16 cast, half the weight DMA bytes; biases / LN / embeddings stay f32)
# ----------------------------------------------------------------------------
def init_params(key, num_ent, num_rel, embed_dim, hidden_dim, trans_layer, max_seq_len):
    keys = list(jax.random.split(key, 64))
    kit = iter(keys)

    def xavier(shape):
        fan_in, fan_out = shape[0], shape[-1]
        std = math.sqrt(2.0 / (fan_in + fan_out))
        return jax.random.normal(next(kit), shape, jnp.float32) * std

    def xavier_bf16(shape):
        return xavier(shape).astype(jnp.bfloat16)

    ent_emb = xavier((num_ent, embed_dim))
    ent_emb = ent_emb.at[0].set(0.0).at[-1].set(0.0)

    phases = 2.0 * jnp.pi * jax.random.uniform(next(kit), (num_rel, embed_dim // 2))
    init_rel = jnp.concatenate(
        [
            jnp.concatenate([jnp.cos(phases), jnp.sin(phases)], axis=-1),
            jnp.concatenate([jnp.cos(phases), -jnp.sin(phases)], axis=-1),
        ],
        axis=0,
    )
    init_rel = init_rel.at[0].set(0.0)

    conv1 = dict(
        w_loop=xavier_bf16((embed_dim, embed_dim)),
        w_in=xavier_bf16((embed_dim, embed_dim)),
        w_out=xavier_bf16((embed_dim, embed_dim)),
        w_rel=xavier_bf16((embed_dim, embed_dim)),
        loop_rel=xavier((1, embed_dim)),
        bias=jnp.zeros((embed_dim,), jnp.float32),
    )

    pos_emb = xavier((max_seq_len, embed_dim))

    layers = []
    for _ in range(trans_layer):
        wq = xavier((embed_dim, embed_dim))
        wk = xavier((embed_dim, embed_dim))
        wv = xavier((embed_dim, embed_dim))
        layers.append(
            dict(
                wqkv=jnp.concatenate([wq, wk, wv], axis=1).astype(jnp.bfloat16),  # (E, 3E) fused
                bqkv=jnp.zeros((3 * embed_dim,), jnp.float32),
                wo=xavier_bf16((embed_dim, embed_dim)),
                bo=jnp.zeros((embed_dim,), jnp.float32),
                w1=xavier_bf16((embed_dim, hidden_dim)),
                b1=jnp.zeros((hidden_dim,), jnp.float32),
                w2=xavier_bf16((hidden_dim, embed_dim)),
                b2=jnp.zeros((embed_dim,), jnp.float32),
                ln1_g=jnp.ones((embed_dim,), jnp.float32),
                ln1_b=jnp.zeros((embed_dim,), jnp.float32),
                ln2_g=jnp.ones((embed_dim,), jnp.float32),
                ln2_b=jnp.zeros((embed_dim,), jnp.float32),
            )
        )

    return dict(
        ent_emb=ent_emb,
        init_rel=init_rel,
        conv1=conv1,
        pos_emb=pos_emb,
        layers=layers,
        fc_w=xavier_bf16((embed_dim, embed_dim)),
        fc_b=jnp.zeros((embed_dim,), jnp.float32),
    )


if __name__ == "__main__":
    NUM_ENT = 16
    NUM_REL = 3          # init_rel has 2*NUM_REL rows (forward + inverse relations)
    EMBED = 32
    HIDDEN = 64          # transformer feed-forward dim
    HEADS = 4
    TRANS_LAYERS = 2
    MAX_SEQ = 16
    BS = 2
    N_EDGES = 10         # per direction
    NQ = 2               # qualifier pairs -> seq len = 2 + 2*NQ = 6

    root = jax.random.PRNGKey(0)
    pkey, dkey = jax.random.split(root)
    params = init_params(pkey, NUM_ENT, NUM_REL, EMBED, HIDDEN, TRANS_LAYERS, MAX_SEQ)

    k1, k2, k3 = jax.random.split(dkey, 3)
    src = jax.random.randint(k1, (N_EDGES,), 0, NUM_ENT, dtype=jnp.int32)
    dst = jax.random.randint(k2, (N_EDGES,), 0, NUM_ENT, dtype=jnp.int32)
    edge_index = jnp.concatenate(
        [jnp.stack([src, dst]), jnp.stack([dst, src])], axis=1
    )  # (2, 2*N_EDGES): first half = forward edges, second half = reverse edges
    etype = jax.random.randint(k3, (N_EDGES,), 0, NUM_REL, dtype=jnp.int32)
    edge_type = jnp.concatenate([etype, etype + NUM_REL])

    # batch_input_seqs rows: [sub, rel, obj, pad, qual0, qual1, qual2, qual3]
    batch_input_seqs = jnp.array(
        [
            [2, 1, 5, 0, 3, 2, 0, 0],   # zero quals -> padded positions in the mask
            [7, 4, 9, 0, 5, 1, 7, 3],
        ],
        dtype=jnp.int32,
    )

    score = model_forward(params, batch_input_seqs, edge_index, edge_type, HEADS)
    score = jax.block_until_ready(score)

    assert score.shape == (BS, NUM_ENT), score.shape
    assert bool(jnp.all(jnp.isfinite(score)))
    print("KERNEL_OK")
</pallas_src>

<mosaic_0001>
module attributes {stable_mosaic.version = 11 : i64} {
  func.func @kernel(%arg0: i32, %arg1: memref<16x32xf32, #tpu.memory_space<vmem>>, %arg2: memref<16x32xbf16, #tpu.memory_space<vmem>>, %arg3: memref<16x32xbf16, #tpu.memory_space<vmem>>, %arg4: memref<16x1xf32, #tpu.memory_space<vmem>>, %arg5: memref<32x32xbf16, #tpu.memory_space<vmem>>, %arg6: memref<32x32xbf16, #tpu.memory_space<vmem>>, %arg7: memref<16x32xf32, #tpu.memory_space<vmem>>) attributes {dimension_semantics = [#tpu.dimension_semantics<parallel>], iteration_bounds = array<i64: 1>, scalar_prefetch = 0 : i64, scratch_operands = 0 : i64, tpu.core_type = #tpu.core_type<tc>, window_params = [{transform_indices = @transform_0, window_bounds = array<i64: 16, 32>}, {transform_indices = @transform_1, window_bounds = array<i64: 16, 32>}, {transform_indices = @transform_2, window_bounds = array<i64: 16, 32>}, {transform_indices = @transform_3, window_bounds = array<i64: 16, 1>}, {pipeline_mode = #tpu.pipeline_mode<synchronous>, transform_indices = @transform_4, window_bounds = array<i64: 32, 32>}, {pipeline_mode = #tpu.pipeline_mode<synchronous>, transform_indices = @transform_5, window_bounds = array<i64: 32, 32>}, {transform_indices = @transform_6, window_bounds = array<i64: 16, 32>}]} {
    %c0 = arith.constant 0 : index
    %c0_0 = arith.constant 0 : index
    %0 = vector.load %arg1[%c0, %c0_0] : memref<16x32xf32, #tpu.memory_space<vmem>>, vector<16x32xf32>
    %c0_1 = arith.constant 0 : index
    %c0_2 = arith.constant 0 : index
    %1 = vector.load %arg2[%c0_1, %c0_2] : memref<16x32xbf16, #tpu.memory_space<vmem>>, vector<16x32xbf16>
    %2 = arith.extf %1 : vector<16x32xbf16> to vector<16x32xf32>
    %3 = arith.mulf %0, %2 : vector<16x32xf32>
    %4 = arith.truncf %3 : vector<16x32xf32> to vector<16x32xbf16>
    %c0_3 = arith.constant 0 : index
    %c0_4 = arith.constant 0 : index
    %5 = vector.load %arg3[%c0_3, %c0_4] : memref<16x32xbf16, #tpu.memory_space<vmem>>, vector<16x32xbf16>
    %6 = arith.extf %5 : vector<16x32xbf16> to vector<16x32xf32>
    %7 = arith.mulf %0, %6 : vector<16x32xf32>
    %8 = arith.truncf %7 : vector<16x32xf32> to vector<16x32xbf16>
    %c0_5 = arith.constant 0 : index
    %c0_6 = arith.constant 0 : index
    %9 = vector.load %arg5[%c0_5, %c0_6] : memref<32x32xbf16, #tpu.memory_space<vmem>>, vector<32x32xbf16>
    %cst = arith.constant dense<0.000000e+00> : vector<16x32xf32>
    %10 = tpu.matmul %4, %9, %cst {dimension_numbers = #tpu.dot_dimension_numbers<[1], [0], [0], [1], [0, 0, 1, 1], [], []>} : vector<16x32xbf16>, vector<32x32xbf16>, vector<16x32xf32> -> vector<16x32xf32>
    %c0_7 = arith.constant 0 : index
    %c0_8 = arith.constant 0 : index
    %11 = vector.load %arg6[%c0_7, %c0_8] : memref<32x32xbf16, #tpu.memory_space<vmem>>, vector<32x32xbf16>
    %cst_9 = arith.constant dense<0.000000e+00> : vector<16x32xf32>
    %12 = tpu.matmul %8, %11, %cst_9 {dimension_numbers = #tpu.dot_dimension_numbers<[1], [0], [0], [1], [0, 0, 1, 1], [], []>} : vector<16x32xbf16>, vector<32x32xbf16>, vector<16x32xf32> -> vector<16x32xf32>
    %13 = arith.addf %10, %12 : vector<16x32xf32>
    %c0_10 = arith.constant 0 : index
    %c0_11 = arith.constant 0 : index
    %14 = vector.load %arg4[%c0_10, %c0_11] : memref<16x1xf32, #tpu.memory_space<vmem>>, vector<16x1xf32>
    %15 = vector.broadcast %14 : vector<16x1xf32> to vector<16x32xf32>
    %16 = arith.mulf %13, %15 : vector<16x32xf32>
    %c0_12 = arith.constant 0 : index
    %c0_13 = arith.constant 0 : index
    %17 = vector.load %arg7[%c0_12, %c0_13] : memref<16x32xf32, #tpu.memory_space<vmem>>, vector<16x32xf32>
    tpu.vector_store %arg7[%c0_12, %c0_13], %16 {strides = array<i32>} : memref<16x32xf32, #tpu.memory_space<vmem>>, vector<16x32xf32>,
    return
  }
  func.func @transform_0(%arg0: i32) -> (i32, i32) {
    %c0_i32 = arith.constant 0 : i32
    %c0_i32_0 = arith.constant 0 : i32
    return %arg0, %c0_i32 : i32, i32
  }
  func.func @transform_1(%arg0: i32) -> (i32, i32) {
    %c0_i32 = arith.constant 0 : i32
    %c0_i32_0 = arith.constant 0 : i32
    return %arg0, %c0_i32 : i32, i32
  }
  func.func @transform_2(%arg0: i32) -> (i32, i32) {
    %c0_i32 = arith.constant 0 : i32
    %c0_i32_0 = arith.constant 0 : i32
    return %arg0, %c0_i32 : i32, i32
  }
  func.func @transform_3(%arg0: i32) -> (i32, i32) {
    %c0_i32 = arith.constant 0 : i32
    %c0_i32_0 = arith.constant 0 : i32
    return %arg0, %c0_i32 : i32, i32
  }
  func.func @transform_4(%arg0: i32) -> (i32, i32) {
    %c0_i32 = arith.constant 0 : i32
    %c0_i32_0 = arith.constant 0 : i32
    %c0_i32_1 = arith.constant 0 : i32
    return %c0_i32, %c0_i32_0 : i32, i32
  }
  func.func @transform_5(%arg0: i32) -> (i32, i32) {
    %c0_i32 = arith.constant 0 : i32
    %c0_i32_0 = arith.constant 0 : i32
    %c0_i32_1 = arith.constant 0 : i32
    return %c0_i32, %c0_i32_0 : i32, i32
  }
  func.func @transform_6(%arg0: i32) -> (i32, i32) {
    %c0_i32 = arith.constant 0 : i32
    %c0_i32_0 = arith.constant 0 : i32
    return %arg0, %c0_i32 : i32, i32
  }
}

</mosaic_0001>

<llo_original>
// kernel: tpu_custom_call.1
$region0: #{tpu_custom_call.1}
  #allocation0 [shape = 'u32[]', space=smem, size = 0x4, offset = 0x4, fixed_abs, tag = 'smem constant byte address 0x4 - core index']
  #allocation1 [shape = 'u32[144,128]{1,0:T(1,128)}', space=vmem, size = 0x12000, scoped, tag = 'internal scratch']
  %s0 = inlined_call_operand.vmem [shape: f32[16,32], index: 0, kind: input, shape index: {}]
  %s1 = inlined_call_operand.hbm [shape: bf16[16,32], index: 1, kind: input, shape index: {}]
  %s2 = inlined_call_operand.hbm [shape: bf16[16,32], index: 2, kind: input, shape index: {}]
  %s3 = inlined_call_operand.vmem [shape: f32[16,1], index: 3, kind: input, shape index: {}]
  %s4 = inlined_call_operand.vmem [shape: bf16[32,32], index: 4, kind: input, shape index: {}]
  %s5 = inlined_call_operand.hbm [shape: bf16[32,32], index: 5, kind: input, shape index: {}]
  %s6 = inlined_call_operand.hbm [shape: f32[16,32], index: 6, kind: output, shape index: {}]
  %s7 = sld [smem:[#allocation0]]
  $region46: #{tpu_custom_call.1} parent=0
    _
  %s9 = ssub.s32 1, %s7
  %s10 = scalar_select 0, %s9, %s7
  $region1: #{tpu_custom_call.1} parent=0
    #allocation2 [shape = 'u8[4096]{0}', space=vmem, size = 0x1000, scoped, tag = 'input window, operand 1, single buffered']
    #allocation3 [shape = 's32[1]{0}', space=sflag, size = 0x4, scoped, tag = 'scoped memory for tpu_custom_call.1']
    #allocation4 [shape = 's32[1]{0}', space=sflag, size = 0x4, scoped, tag = 'scoped memory for tpu_custom_call.1']
    #allocation5 [shape = 'u8[4096]{0}', space=vmem, size = 0x1000, scoped, tag = 'input window, operand 2, single buffered']
    #allocation6 [shape = 's32[1]{0}', space=sflag, size = 0x4, scoped, tag = 'scoped memory for tpu_custom_call.1']
    #allocation7 [shape = 'u8[8192]{0}', space=vmem, size = 0x2000, scoped, tag = 'input window, operand 5, single buffered']
    #allocation8 [shape = 'u8[8192]{0}', space=vmem, size = 0x2000, scoped, tag = 'output window, operand 0, single buffered']
    %11 = vsyncpa [#allocation3], 0
    %12 = vsyncpa [#allocation6], 0
    %13 = vsyncpa [#allocation4], 0
    // Predicated region
    $region2: #{tpu_custom_call.1} parent=1 // pred_check
      _
    $region3: #{tpu_custom_call.1} parent=1 // pred_check_branch
      %15 = sbr.rel (0) target = $region5
    $region4: #{tpu_custom_call.1} parent=1 // pred_region
      _
    $region5: #{tpu_custom_call.1} parent=1 // pred_fallthru
      _
    // Predicated region
    $region6: #{tpu_custom_call.1} parent=1 // pred_check
      _
    $region7: #{tpu_custom_call.1} parent=1 // pred_check_branch
      %17 = sbr.rel (0) target = $region9
    $region8: #{tpu_custom_call.1} parent=1 // pred_region
      %s19 = ssub.s32 128, 128
      %20 = vsyncadd [#allocation3], %s19
      %s21 = sshll.u32 [#allocation2], 4
      %s22 = int_to_ptr.vmem [resolvable:$true] %s21
      %27 = dma.hbm_to_vmem [thread:$0]  %s1, 128, %s22, [#allocation3], 64, 64, 4
    $region9: #{tpu_custom_call.1} parent=1 // pred_fallthru
      _
    // Predicated region
    $region10: #{tpu_custom_call.1} parent=1 // pred_check
      _
    $region11: #{tpu_custom_call.1} parent=1 // pred_check_branch
      %29 = sbr.rel (0) target = $region13
    $region12: #{tpu_custom_call.1} parent=1 // pred_region
      %s31 = ssub.s32 128, 128
      %32 = vsyncadd [#allocation6], %s31
      %s33 = sshll.u32 [#allocation5], 4
      %s34 = int_to_ptr.vmem [resolvable:$true] %s33
      %39 = dma.hbm_to_vmem [thread:$0]  %s2, 128, %s34, [#allocation6], 64, 64, 4
    $region13: #{tpu_custom_call.1} parent=1 // pred_fallthru
      _
    // Predicated region
    $region14: #{tpu_custom_call.1} parent=1 // pred_check
      _
    $region15: #{tpu_custom_call.1} parent=1 // pred_check_branch
      %41 = sbr.rel (0) target = $region17
    $region16: #{tpu_custom_call.1} parent=1 // pred_region
      _
    $region17: #{tpu_custom_call.1} parent=1 // pred_fallthru
      _
    // Predicated region
    $region18: #{tpu_custom_call.1} parent=1 // pred_check
      _
    $region19: #{tpu_custom_call.1} parent=1 // pred_check_branch
      %43 = sbr.rel (0) target = $region21
    $region20: #{tpu_custom_call.1} parent=1 // pred_region
      _
    $region21: #{tpu_custom_call.1} parent=1 // pred_fallthru
      _
    // Predicated region
    $region22: #{tpu_custom_call.1} parent=1 // pred_check
      _
    $region23: #{tpu_custom_call.1} parent=1 // pred_check_branch
      %45 = sbr.rel (0) target = $region25
    $region24: #{tpu_custom_call.1} parent=1 // pred_region
      %s47 = ssub.s32 256, 256
      %48 = vsyncadd [#allocation6], %s47
      %s49 = sshll.u32 [#allocation7], 4
      %s50 = int_to_ptr.vmem [resolvable:$true] %s49
      %55 = dma.hbm_to_vmem [thread:$0]  %s5, 256, %s50, [#allocation6], 64, 64, 4
    $region25: #{tpu_custom_call.1} parent=1 // pred_fallthru
      _
    // Predicated region
    $region26: #{tpu_custom_call.1} parent=1 // pred_check
      _
    $region27: #{tpu_custom_call.1} parent=1 // pred_check_branch
      %57 = sbr.rel (0) target = $region29
    $region28: #{tpu_custom_call.1} parent=1 // pred_region
      %58 = dma.done [#allocation3], 128
    $region29: #{tpu_custom_call.1} parent=1 // pred_fallthru
      _
    // Predicated region
    $region30: #{tpu_custom_call.1} parent=1 // pred_check
      _
    $region31: #{tpu_custom_call.1} parent=1 // pred_check_branch
      %60 = sbr.rel (0) target = $region33
    $region32: #{tpu_custom_call.1} parent=1 // pred_region
      %61 = dma.done [#allocation6], 128
    $region33: #{tpu_custom_call.1} parent=1 // pred_fallthru
      _
    // Predicated region
    $region34: #{tpu_custom_call.1} parent=1 // pred_check
      _
    $region35: #{tpu_custom_call.1} parent=1 // pred_check_branch
      %63 = sbr.rel (0) target = $region37
    $region36: #{tpu_custom_call.1} parent=1 // pred_region
      %64 = dma.done [#allocation6], 256
    $region37: #{tpu_custom_call.1} parent=1 // pred_fallthru
      _
    %v66 = vld [vmem:[%s0] sm:$0xff]
    %v67 = vld [vmem:[%s0 + $0x8] sm:$0xff]
    %v68 = vld [vmem:[#allocation2] sm:$0xf]
    %v69 = vld [vmem:[#allocation2 + $0x4] sm:$0xf]
    %v70 = vunpack.c.l.bf16 %v68
    %v71 = vunpack.c.l.bf16 %v69
    %v72 = vmul.f32 %v66, %v70
    %v73 = vmul.f32 %v67, %v71
    %v74 = vpack.c.bf16 %v73, %v72
    %v75 = vld [vmem:[#allocation5] sm:$0xf]
    %v76 = vld [vmem:[#allocation5 + $0x4] sm:$0xf]
    %v77 = vunpack.c.l.bf16 %v75
    %v78 = vunpack.c.l.bf16 %v76
    %v79 = vmul.f32 %v66, %v77
    %v80 = vmul.f32 %v67, %v78
    %v81 = vpack.c.bf16 %v80, %v79
    %v82 = vld [vmem:[%s4] sm:$0xf]
    %v83 = vld [vmem:[%s4 + $0x4] sm:$0xf]
    %v84 = vld [vmem:[%s4 + $0x8] sm:$0xf]
    %v85 = vld [vmem:[%s4 + $0xc] sm:$0xf]
    %v86 = vld [vmem:[#allocation7] sm:$0xf]
    %v87 = vld [vmem:[#allocation7 + $0x4] sm:$0xf]
    %v88 = vld [vmem:[#allocation7 + $0x8] sm:$0xf]
    %v89 = vld [vmem:[#allocation7 + $0xc] sm:$0xf]
    %v94 = vunpack.c.l.b16 %v86
    %v95 = vunpack.c.l.b16 %v87
    %v96 = vunpack.c.l.b16 %v88
    %v97 = vunpack.c.l.b16 %v89
    %v98 = vpack.c.b16 %v95, %v94
    %v99 = vpack.c.b16 %v97, %v96
    %vm102 = vcmask 261120
    %v104 = vsel %vm102, %v81, 0
    %106 = vmatprep.subr.bf16.mxu0 0
    %107 = vmatpush1.bf16.msra.mxu0 %v98
    %108 = vmatprep.subr.bf16.mxu0 0
    %109 = vmatpush1.bf16.msra.mxu0 %v99
    %110 = vmatprep.subr.bf16.mxu0 0
    %111 = vmatpush1.bf16.msra.mxu0 0
    %112 = vmatprep.subr.bf16.mxu0 0
    %113 = vmatpush1.bf16.msra.mxu0 0
    %114 = vmatprep.subr.bf16.mxu0 0
    %115 = vmatpush1.bf16.msra.mxu0 0
    %116 = vmatprep.subr.bf16.mxu0 0
    %117 = vmatpush1.bf16.msra.mxu0 0
    %118 = vmatprep.subr.bf16.mxu0 0
    %119 = vmatpush1.bf16.msra.mxu0 0
    %120 = vmatprep.subr.bf16.mxu0 0
    %121 = vmatpush1.bf16.msra.mxu0 0
    %122 = vmatprep.subr.bf16.mxu0 0
    %123 = vmatpush1.bf16.msra.mxu0 0
    %124 = vmatprep.subr.bf16.mxu0 0
    %125 = vmatpush1.bf16.msra.mxu0 0
    %126 = vmatprep.subr.bf16.mxu0 0
    %127 = vmatpush1.bf16.msra.mxu0 0
    %128 = vmatprep.subr.bf16.mxu0 0
    %129 = vmatpush1.bf16.msra.mxu0 0
    %130 = vmatprep.subr.bf16.mxu0 0
    %131 = vmatpush1.bf16.msra.mxu0 0
    %132 = vmatprep.subr.bf16.mxu0 0
    %133 = vmatpush1.bf16.msra.mxu0 0
    %134 = vmatprep.subr.bf16.mxu0 0
    %135 = vmatpush1.bf16.msra.mxu0 0
    %136 = vmatprep.subr.bf16.mxu0 0
    %137 = vmatpush1.bf16.msra.mxu0 0
    %138 = vmatprep.mubr.bf16.mxu0 0
    %139 = vmatmul.mubr.bf16.gmra.mrb[0].mxu0 %v104
    %v140 = vpop.f32.mrb[0].mxu0
    %v141 = vadd.f32 0.0, %v140
    %v142 = vpop.f32.mrb[0].mxu0
    %v143 = vpop.f32.mrb[0].mxu0
    %v144 = vadd.f32 0.0, %v143
    %v145 = vpop.f32.mrb[0].mxu0
    %146 = vdwg.mxu0
    %v151 = vunpack.c.l.b16 %v82
    %v152 = vunpack.c.l.b16 %v83
    %v153 = vunpack.c.l.b16 %v84
    %v154 = vunpack.c.l.b16 %v85
    %v155 = vpack.c.b16 %v152, %v151
    %v156 = vpack.c.b16 %v154, %v153
    %v160 = vsel %vm102, %v74, 0
    %162 = vmatprep.subr.bf16.mxu0 0
    %163 = vmatpush1.bf16.msra.mxu0 %v155
    %164 = vmatprep.subr.bf16.mxu0 0
    %165 = vmatpush1.bf16.msra.mxu0 %v156
    %166 = vmatprep.subr.bf16.mxu0 0
    %167 = vmatpush1.bf16.msra.mxu0 0
    %168 = vmatprep.subr.bf16.mxu0 0
    %169 = vmatpush1.bf16.msra.mxu0 0
    %170 = vmatprep.subr.bf16.mxu0 0
    %171 = vmatpush1.bf16.msra.mxu0 0
    %172 = vmatprep.subr.bf16.mxu0 0
    %173 = vmatpush1.bf16.msra.mxu0 0
    %174 = vmatprep.subr.bf16.mxu0 0
    %175 = vmatpush1.bf16.msra.mxu0 0
    %176 = vmatprep.subr.bf16.mxu0 0
    %177 = vmatpush1.bf16.msra.mxu0 0
    %178 = vmatprep.subr.bf16.mxu0 0
    %179 = vmatpush1.bf16.msra.mxu0 0
    %180 = vmatprep.subr.bf16.mxu0 0
    %181 = vmatpush1.bf16.msra.mxu0 0
    %182 = vmatprep.subr.bf16.mxu0 0
    %183 = vmatpush1.bf16.msra.mxu0 0
    %184 = vmatprep.subr.bf16.mxu0 0
    %185 = vmatpush1.bf16.msra.mxu0 0
    %186 = vmatprep.subr.bf16.mxu0 0
    %187 = vmatpush1.bf16.msra.mxu0 0
    %188 = vmatprep.subr.bf16.mxu0 0
    %189 = vmatpush1.bf16.msra.mxu0 0
    %190 = vmatprep.subr.bf16.mxu0 0
    %191 = vmatpush1.bf16.msra.mxu0 0
    %192 = vmatprep.subr.bf16.mxu0 0
    %193 = vmatpush1.bf16.msra.mxu0 0
    %194 = vmatprep.mubr.bf16.mxu0 0
    %195 = vmatmul.mubr.bf16.gmra.mrb[0].mxu0 %v160
    %v196 = vpop.f32.mrb[0].mxu0
    %v197 = vadd.f32 %v141, %v196
    %v198 = vpop.f32.mrb[0].mxu0
    %v199 = vpop.f32.mrb[0].mxu0
    %v200 = vadd.f32 %v144, %v199
    %v201 = vpop.f32.mrb[0].mxu0
    %202 = vdwg.mxu0
    %v203 = vld [vmem:[%s3] sm:$0xff]
    %v204 = vld [vmem:[%s3 + $0x8] sm:$0xff]
    %206 = vset.pattern.permute.xlu0 0
    %207 = vperm.xlu0 %206, %v203
    %v208 = vpop.permute.xlu0 %207
    %211 = vset.pattern.permute.xlu0 0
    %212 = vperm.xlu0 %211, %v204
    %v213 = vpop.permute.xlu0 %212
    %v215 = vmul.f32 %v197, %v208
    %v216 = vmul.f32 %v200, %v213
    %217 = vst.msk [vmem:[#allocation8] sm:$0xff] %vm102, %v215
    %218 = vst.msk [vmem:[#allocation8 + $0x8] sm:$0xff] %vm102, %v216
    // Predicated region
    $region38: #{tpu_custom_call.1} parent=1 // pred_check
      _
    $region39: #{tpu_custom_call.1} parent=1 // pred_check_branch
      %220 = sbr.rel (0) target = $region41
    $region40: #{tpu_custom_call.1} parent=1 // pred_region
      %s222 = ssub.s32 256, 256
      %223 = vsyncadd [#allocation4], %s222
      %s224 = sshll.u32 [#allocation8], 4
      %s225 = int_to_ptr.vmem [resolvable:$true] %s224
      %230 = dma.vmem_to_hbm [thread:$0]  %s225, 256, %s6, [#allocation4], 128, 128, 8
    $region41: #{tpu_custom_call.1} parent=1 // pred_fallthru
      _
    // Predicated region
    $region42: #{tpu_custom_call.1} parent=1 // pred_check
      _
    $region43: #{tpu_custom_call.1} parent=1 // pred_check_branch
      %232 = sbr.rel (0) target = $region45
    $region44: #{tpu_custom_call.1} parent=1 // pred_region
      %233 = dma.done [#allocation4], 256
    $region45: #{tpu_custom_call.1} parent=1 // pred_fallthru
      _
    %234 = vsyncpa [#allocation3], 1
    %235 = vsyncpa [#allocation6], 1
    %236 = vsyncpa [#allocation4], 1

</llo_original>
